<compile_context>
chip_gen: v7x
topology: tpu7x:2x2x1
jax: 0.10.0
libtpu: 0.0.40
codegen_flags: <defaults>
</compile_context>

<pallas_src>
import jax
import jax.numpy as jnp
from jax.experimental import pallas as pl
from jax.experimental.pallas import tpu as pltpu

# Small, module-consistent sizes for the self-test (real model: embed 512, heads 8).
N = 2              # batch
L = 8              # sequence length
HEADS = 4
HEAD_DIM = 32
EMBED = HEADS * HEAD_DIM   # 128 -> lane-dense output blocks


def _mhsa_kernel(x_ref, bias_ref, wqkv_ref, wo_ref, bo_ref, out_ref):
    # x_ref    : (1, H*L, D) head-major activations for this batch element (row = h*L + l)
    # bias_ref : (1, 1, L)   additive key-padding bias (0 valid / -1e20 masked)
    # wqkv_ref : (D, 3D)     [wq.T * 1/sqrt(E) | wk.T | wv.T], shared across the grid
    # wo_ref   : (H, D, E)   fc_out.weight.T split per head, shared across the grid
    # bo_ref   : (1, E)      fc_out bias
    # out_ref  : (1, L, E)
    d = wqkv_ref.shape[0]
    h = wo_ref.shape[0]
    l = x_ref.shape[1] // h

    # Fused Q/K/V projection: a single 2-D matmul with tall M = H*L.
    qkv = jnp.dot(x_ref[0], wqkv_ref[...], preferred_element_type=jnp.float32)   # (H*L, 3D)
    q = qkv[:, 0:d].reshape(h, l, d)           # score scale already folded into the weight
    k = qkv[:, d:2 * d].reshape(h, l, d)
    v = qkv[:, 2 * d:3 * d].reshape(h, l, d)

    # Per-head scores; contracting the last dims avoids any in-kernel K transpose.
    s = jnp.einsum('hqd,hkd->hqk', q, k, preferred_element_type=jnp.float32)     # (H, L, L)
    # Additive mask bias == masked_fill(-1e20) then scale, whenever a row has at least
    # one valid key (masked logits underflow exp() to exactly 0 after max-subtraction).
    s = s + bias_ref[...]

    # Numerically-stable softmax over keys, exact normalization, all in f32.
    s = s - jnp.max(s, axis=-1, keepdims=True)
    p = jnp.exp(s)
    p = p / jnp.sum(p, axis=-1, keepdims=True)

    ctx = jnp.einsum('hqk,hkd->hqd', p, v, preferred_element_type=jnp.float32)   # (H, L, D)

    # fc_out fused with the head merge:
    #   concat_h(ctx_h) @ Wo^T + bo  ==  sum_h ctx_h @ Wo^T[h*D:(h+1)*D, :] + bo
    part = jnp.einsum('hqd,hde->hqe', ctx, wo_ref[...],
                      preferred_element_type=jnp.float32)                        # (H, L, E)
    out = jnp.sum(part, axis=0) + bo_ref[...]                                    # (L, E)
    out_ref[...] = out[None].astype(out_ref.dtype)


@jax.jit
def multi_head_self_attention(x, mask, wv, wk, wq, wo, bo):
    """Forward of MultiHeadSelfAttention for the self-attention case (value==key==query==x)."""
    n, l, e = x.shape
    d = wq.shape[0]
    h = e // d
    scale = 1.0 / (e ** 0.5)

    # Head-major rows (h*L + l) so the kernel needs no transposes.  At real sizes do this
    # head split with a heads grid axis + BlockSpec index_map offsets instead.
    x_hm = x.reshape(n, l, h, d).transpose(0, 2, 1, 3).reshape(n, h * l, d)

    # Dense shared projection weights (nn.Linear: y = x @ W.T); the 1/sqrt(E) score scale
    # is folded into the Q columns so the kernel never rescales the (L, L) score tensor.
    w_qkv = jnp.concatenate([wq.T * scale, wk.T, wv.T], axis=1)      # (D, 3D)
    wo_hde = wo.T.reshape(h, d, e)                                   # (H, D, E)
    bo2 = bo.reshape(1, e)

    # Additive key-padding bias from the (N, 1, 1, L) boolean mask.
    bias = jnp.where(mask.reshape(n, 1, l), 0.0, -1e20).astype(jnp.float32)

    return pl.pallas_call(
        _mhsa_kernel,
        out_shape=jax.ShapeDtypeStruct((n, l, e), jnp.float32),
        grid_spec=pltpu.PrefetchScalarGridSpec(
            num_scalar_prefetch=0,
            grid=(n,),
            in_specs=[
                pl.BlockSpec((1, h * l, d), lambda b: (b, 0, 0)),
                pl.BlockSpec((1, 1, l), lambda b: (b, 0, 0)),
                pl.BlockSpec((d, 3 * d), lambda b: (0, 0)),       # shared, VMEM-resident
                pl.BlockSpec((h, d, e), lambda b: (0, 0, 0)),     # shared, VMEM-resident
                pl.BlockSpec((1, e), lambda b: (0, 0)),           # shared, VMEM-resident
            ],
            out_specs=pl.BlockSpec((1, l, e), lambda b: (b, 0, 0)),
        ),
        compiler_params=pltpu.CompilerParams(
            dimension_semantics=("parallel",)),
    )(x_hm, bias, w_qkv, wo_hde, bo2)


def _reference(values, keys, query, mask, wv, wk, wq, wo, bo):
    # Pure-JAX replica of the PyTorch forward, for verification.
    n, ql, e = query.shape
    v = values.reshape(n, -1, HEADS, HEAD_DIM) @ wv.T
    k = keys.reshape(n, -1, HEADS, HEAD_DIM) @ wk.T
    q = query.reshape(n, -1, HEADS, HEAD_DIM) @ wq.T
    att = jnp.einsum('nqhd,nkhd->nhqk', q, k)
    att = jnp.where(mask == 0, jnp.float32(-1e20), att)
    att = jax.nn.softmax(att / (e ** 0.5), axis=3)
    out = jnp.einsum('nhql,nlhd->nqhd', att, v).reshape(n, ql, e)
    return out @ wo.T + bo


if __name__ == "__main__":
    key = jax.random.PRNGKey(0)
    k1, k2, k3, k4, k5, k6 = jax.random.split(key, 6)

    # Deterministic parameters (shapes from MultiHeadSelfAttention.__init__).
    wv = jax.random.normal(k1, (HEAD_DIM, HEAD_DIM), jnp.float32) * 0.1
    wk = jax.random.normal(k2, (HEAD_DIM, HEAD_DIM), jnp.float32) * 0.1
    wq = jax.random.normal(k3, (HEAD_DIM, HEAD_DIM), jnp.float32) * 0.1
    wo = jax.random.normal(k4, (EMBED, EMBED), jnp.float32) * 0.1
    bo = jax.random.normal(k5, (EMBED,), jnp.float32) * 0.1

    # Self-attention input and key-padding mask, like the reference script:
    #   mask = (tokens != 0).unsqueeze(1).unsqueeze(2)
    x = jax.random.normal(k6, (N, L, EMBED), jnp.float32)
    lens = jnp.array([5, 3], dtype=jnp.int32)
    key_valid = jnp.arange(L)[None, :] < lens[:, None]               # (N, L) bool
    mask = key_valid[:, None, None, :]                               # (N, 1, 1, L)

    out = multi_head_self_attention(x, mask, wv, wk, wq, wo, bo)
    out = jax.block_until_ready(out)

    ref = _reference(x, x, x, mask, wv, wk, wq, wo, bo)
    assert out.shape == (N, L, EMBED)
    # Tolerance covers default-precision MXU matmul passes vs the XLA reference.
    assert jnp.allclose(out, ref, atol=2e-2, rtol=2e-2), "mismatch vs reference"

    print("KERNEL_OK")
</pallas_src>

<mosaic_0001>
module attributes {stable_mosaic.version = 11 : i64} {
  func.func @_mhsa_kernel(%arg0: i32, %arg1: memref<1x32x32xf32, #tpu.memory_space<vmem>>, %arg2: memref<1x1x8xf32, #tpu.memory_space<vmem>>, %arg3: memref<32x96xf32, #tpu.memory_space<vmem>>, %arg4: memref<4x32x128xf32, #tpu.memory_space<vmem>>, %arg5: memref<1x128xf32, #tpu.memory_space<vmem>>, %arg6: memref<1x8x128xf32, #tpu.memory_space<vmem>>) attributes {dimension_semantics = [#tpu.dimension_semantics<parallel>], iteration_bounds = array<i64: 2>, scalar_prefetch = 0 : i64, scratch_operands = 0 : i64, tpu.core_type = #tpu.core_type<tc>, window_params = [{transform_indices = @transform_0, window_bounds = array<i64: 1, 32, 32>}, {transform_indices = @transform_1, window_bounds = array<i64: 1, 1, 8>}, {pipeline_mode = #tpu.pipeline_mode<synchronous>, transform_indices = @transform_2, window_bounds = array<i64: 32, 96>}, {pipeline_mode = #tpu.pipeline_mode<synchronous>, transform_indices = @transform_3, window_bounds = array<i64: 4, 32, 128>}, {pipeline_mode = #tpu.pipeline_mode<synchronous>, transform_indices = @transform_4, window_bounds = array<i64: 1, 128>}, {transform_indices = @transform_5, window_bounds = array<i64: 1, 8, 128>}]} {
    %c0 = arith.constant 0 : index
    %c0_0 = arith.constant 0 : index
    %c0_1 = arith.constant 0 : index
    %0 = vector.load %arg1[%c0, %c0_0, %c0_1] : memref<1x32x32xf32, #tpu.memory_space<vmem>>, vector<1x32x32xf32>
    %1 = vector.shape_cast %0 : vector<1x32x32xf32> to vector<32x32xf32>
    %c0_2 = arith.constant 0 : index
    %c0_3 = arith.constant 0 : index
    %2 = vector.load %arg3[%c0_2, %c0_3] : memref<32x96xf32, #tpu.memory_space<vmem>>, vector<32x96xf32>
    %cst = arith.constant dense<0.000000e+00> : vector<32x96xf32>
    %3 = tpu.matmul %1, %2, %cst {dimension_numbers = #tpu.dot_dimension_numbers<[1], [0], [0], [1], [0, 0, 1, 1], [], []>} : vector<32x32xf32>, vector<32x96xf32>, vector<32x96xf32> -> vector<32x96xf32>
    %4 = vector.extract_strided_slice %3 {offsets = [0, 0], sizes = [32, 32], strides = [1, 1]} : vector<32x96xf32> to vector<32x32xf32>
    %5 = vector.shape_cast %4 : vector<32x32xf32> to vector<4x8x32xf32>
    %6 = vector.extract_strided_slice %3 {offsets = [0, 32], sizes = [32, 32], strides = [1, 1]} : vector<32x96xf32> to vector<32x32xf32>
    %7 = vector.shape_cast %6 : vector<32x32xf32> to vector<4x8x32xf32>
    %8 = vector.extract_strided_slice %3 {offsets = [0, 64], sizes = [32, 32], strides = [1, 1]} : vector<32x96xf32> to vector<32x32xf32>
    %9 = vector.shape_cast %8 : vector<32x32xf32> to vector<4x8x32xf32>
    "tpu.trace_start"() <{level = 10 : i32, message = "hqd,hkd->hqk"}> : () -> ()
    %cst_4 = arith.constant dense<0.000000e+00> : vector<4x8x8xf32>
    %10 = tpu.matmul %5, %7, %cst_4 {dimension_numbers = #tpu.dot_dimension_numbers<[2], [2], [1], [1], [0, 0, 0, 1, 1, 1], [0], [0]>} : vector<4x8x32xf32>, vector<4x8x32xf32>, vector<4x8x8xf32> -> vector<4x8x8xf32>
    "tpu.trace_stop"() : () -> ()
    %c0_5 = arith.constant 0 : index
    %c0_6 = arith.constant 0 : index
    %c0_7 = arith.constant 0 : index
    %11 = vector.load %arg2[%c0_5, %c0_6, %c0_7] : memref<1x1x8xf32, #tpu.memory_space<vmem>>, vector<1x1x8xf32>
    %12 = vector.broadcast %11 : vector<1x1x8xf32> to vector<4x8x8xf32>
    %13 = arith.addf %10, %12 : vector<4x8x8xf32>
    %cst_8 = arith.constant dense<0xFF800000> : vector<4x8xf32>
    %14 = vector.multi_reduction <maximumf>, %13, %cst_8 [2] : vector<4x8x8xf32> to vector<4x8xf32>
    %15 = vector.shape_cast %14 : vector<4x8xf32> to vector<4x8x1xf32>
    %16 = vector.broadcast %15 : vector<4x8x1xf32> to vector<4x8x8xf32>
    %17 = arith.subf %13, %16 : vector<4x8x8xf32>
    %18 = math.exp %17 : vector<4x8x8xf32>
    %cst_9 = arith.constant dense<0.000000e+00> : vector<4x8xf32>
    %19 = vector.multi_reduction <add>, %18, %cst_9 [2] : vector<4x8x8xf32> to vector<4x8xf32>
    %20 = vector.shape_cast %19 : vector<4x8xf32> to vector<4x8x1xf32>
    %21 = vector.broadcast %20 : vector<4x8x1xf32> to vector<4x8x8xf32>
    %22 = arith.divf %18, %21 : vector<4x8x8xf32>
    "tpu.trace_start"() <{level = 10 : i32, message = "hqk,hkd->hqd"}> : () -> ()
    %cst_10 = arith.constant dense<0.000000e+00> : vector<4x8x32xf32>
    %23 = tpu.matmul %22, %9, %cst_10 {dimension_numbers = #tpu.dot_dimension_numbers<[2], [1], [1], [2], [0, 0, 0, 1, 1, 2], [0], [0]>} : vector<4x8x8xf32>, vector<4x8x32xf32>, vector<4x8x32xf32> -> vector<4x8x32xf32>
    "tpu.trace_stop"() : () -> ()
    %c0_11 = arith.constant 0 : index
    %c0_12 = arith.constant 0 : index
    %c0_13 = arith.constant 0 : index
    %24 = vector.load %arg4[%c0_11, %c0_12, %c0_13] : memref<4x32x128xf32, #tpu.memory_space<vmem>>, vector<4x32x128xf32>
    "tpu.trace_start"() <{level = 10 : i32, message = "hqd,hde->hqe"}> : () -> ()
    %cst_14 = arith.constant dense<0.000000e+00> : vector<4x8x128xf32>
    %25 = tpu.matmul %23, %24, %cst_14 {dimension_numbers = #tpu.dot_dimension_numbers<[2], [1], [1], [2], [0, 0, 0, 1, 1, 2], [0], [0]>} : vector<4x8x32xf32>, vector<4x32x128xf32>, vector<4x8x128xf32> -> vector<4x8x128xf32>
    "tpu.trace_stop"() : () -> ()
    %cst_15 = arith.constant dense<0.000000e+00> : vector<8x128xf32>
    %26 = vector.multi_reduction <add>, %25, %cst_15 [0] : vector<4x8x128xf32> to vector<8x128xf32>
    %c0_16 = arith.constant 0 : index
    %c0_17 = arith.constant 0 : index
    %27 = vector.load %arg5[%c0_16, %c0_17] : memref<1x128xf32, #tpu.memory_space<vmem>>, vector<1x128xf32>
    %28 = vector.broadcast %27 : vector<1x128xf32> to vector<8x128xf32>
    %29 = arith.addf %26, %28 : vector<8x128xf32>
    %30 = vector.shape_cast %29 : vector<8x128xf32> to vector<1x8x128xf32>
    %c0_18 = arith.constant 0 : index
    %c0_19 = arith.constant 0 : index
    %c0_20 = arith.constant 0 : index
    %31 = vector.load %arg6[%c0_18, %c0_19, %c0_20] : memref<1x8x128xf32, #tpu.memory_space<vmem>>, vector<1x8x128xf32>
    tpu.vector_store %arg6[%c0_18, %c0_19, %c0_20], %30 {strides = array<i32>} : memref<1x8x128xf32, #tpu.memory_space<vmem>>, vector<1x8x128xf32>,
    return
  }
  func.func @transform_0(%arg0: i32) -> (i32, i32, i32) {
    %c0_i32 = arith.constant 0 : i32
    %c0_i32_0 = arith.constant 0 : i32
    %c0_i32_1 = arith.constant 0 : i32
    return %arg0, %c0_i32, %c0_i32_0 : i32, i32, i32
  }
  func.func @transform_1(%arg0: i32) -> (i32, i32, i32) {
    %c0_i32 = arith.constant 0 : i32
    %c0_i32_0 = arith.constant 0 : i32
    %c0_i32_1 = arith.constant 0 : i32
    return %arg0, %c0_i32, %c0_i32_0 : i32, i32, i32
  }
  func.func @transform_2(%arg0: i32) -> (i32, i32) {
    %c0_i32 = arith.constant 0 : i32
    %c0_i32_0 = arith.constant 0 : i32
    %c0_i32_1 = arith.constant 0 : i32
    return %c0_i32, %c0_i32_0 : i32, i32
  }
  func.func @transform_3(%arg0: i32) -> (i32, i32, i32) {
    %c0_i32 = arith.constant 0 : i32
    %c0_i32_0 = arith.constant 0 : i32
    %c0_i32_1 = arith.constant 0 : i32
    %c0_i32_2 = arith.constant 0 : i32
    return %c0_i32, %c0_i32_0, %c0_i32_1 : i32, i32, i32
  }
  func.func @transform_4(%arg0: i32) -> (i32, i32) {
    %c0_i32 = arith.constant 0 : i32
    %c0_i32_0 = arith.constant 0 : i32
    %c0_i32_1 = arith.constant 0 : i32
    return %c0_i32, %c0_i32_0 : i32, i32
  }
  func.func @transform_5(%arg0: i32) -> (i32, i32, i32) {
    %c0_i32 = arith.constant 0 : i32
    %c0_i32_0 = arith.constant 0 : i32
    %c0_i32_1 = arith.constant 0 : i32
    return %arg0, %c0_i32, %c0_i32_0 : i32, i32, i32
  }
}

</mosaic_0001>

<llo_original>
// kernel: multi_head_self_attention.1
$region0: #{multi_head_self_attention.1}
  #allocation0 [shape = 'u32[]', space=smem, size = 0x4, offset = 0x4, fixed_abs, tag = 'smem constant byte address 0x4 - core index']
  #allocation1 [shape = 'u32[144,128]{1,0:T(1,128)}', space=vmem, size = 0x12000, scoped, tag = 'internal scratch']
  %s0 = inlined_call_operand.vmem [shape: f32[2,32,32], index: 0, kind: input, shape index: {}]
  %s1 = inlined_call_operand.vmem [shape: f32[2,1,8], index: 1, kind: input, shape index: {}]
  %s2 = inlined_call_operand.vmem [shape: f32[32,96], index: 2, kind: input, shape index: {}]
  %s3 = inlined_call_operand.vmem [shape: f32[4,32,128], index: 3, kind: input, shape index: {}]
  %s4 = inlined_call_operand.vmem [shape: f32[1,128], index: 4, kind: input, shape index: {}]
  %s5 = inlined_call_operand.hbm [shape: f32[2,8,128], index: 5, kind: output, shape index: {}]
  %s6 = sld [smem:[#allocation0]]
  $region53: #{multi_head_self_attention.1} parent=0
    _
  %s8 = ssub.s32 1, %s6
  %s9 = scalar_select 0, %s8, %s6
  $region1: #{multi_head_self_attention.1} parent=0
    #allocation2 [shape = 'u8[8192]{0}', space=vmem, size = 0x2000, scoped, tag = 'output window, operand 0']
    #allocation3 [shape = 's32[2]{0}', space=sflag, size = 0x8, scoped, tag = 'scoped memory for multi_head_self_attention.1']
    %10 = vsyncpa [#allocation3], 0
    %s11 = scalar_lea.sflag [#allocation3], 1
    %12 = vsyncpa %s11, 0
    loop: start=0, step=1, limit=4
    $region2: #{multi_head_self_attention.1} parent=1 // loop_pre_header
      _
    $region3: #{multi_head_self_attention.1} parent=1 // loop_header
      %s14 = sphi 0, %s18
      %p15 = scmp.ge.s32.totalorder %s14, 4
      %s24 = sphi 0, %s26
      %s27 = sphi 0, %s24
      %s28 = sphi 0, %s27
      %s44 = sphi 0, %s28
      %s50 = sphi 0, %s52
      %s53 = sphi 0, %s50
      %s54 = sphi 0, %s53
      %s70 = sphi 0, %s54
      %s74 = sphi 0, %s74
      %s76 = sphi 0, %s74
      %s77 = sphi 0, %s76
      %s91 = sphi 0, %s77
      %s95 = sphi 0, %s95
      %s97 = sphi 0, %s95
      %s98 = sphi 0, %s97
      %s112 = sphi 0, %s98
      %s116 = sphi 0, %s116
      %s118 = sphi 0, %s116
      %s119 = sphi 0, %s118
      %s133 = sphi 0, %s119
      %s139 = sphi 0, %s141
      %s142 = sphi 0, %s139
      %s143 = sphi 0, %s142
      %s159 = sphi 0, %s143
    $region4: #{multi_head_self_attention.1} parent=1 // loop_header_branch
      %17 = sbr.rel (%p15) target = $region8
    $region5: #{multi_head_self_attention.1} parent=1 // loop_body
      %s19 = ssub.s32 %s14, 1
      %s20 = ssub.s32 %s14, 2
      %s21 = sadd.s32 %s14, 1
      %s22 = ssub.s32 %s14, %s21
      %p23 = scmp.eq.s32.totalorder %s22, 0
      %s25 = sadd.s32 %s24, 1
      %s26 = scalar_select %p23, %s24, %s25
      %p29 = pneg %p23
      %p30 = scmp.eq.s32.totalorder %s14, 1
      %p31 = por %p29, %p30
      %p32 = scmp.ne.s32.totalorder %s24, %s27
      %p33 = scmp.eq.s32.totalorder %s14, 0
      %p34 = por %p32, %p33
      %p35 = scmp.ne.s32.totalorder %s24, %s27
      %p36 = scmp.eq.s32.totalorder %s19, 1
      %p37 = por %p35, %p36
      %p38 = scmp.ne.s32.totalorder %s27, %s28
      %p39 = scmp.eq.s32.totalorder %s19, 0
      %p40 = por %p38, %p39
      %p41 = scmp.ne.s32.totalorder %s27, %s28
      %p42 = scmp.eq.s32.totalorder %s20, 1
      %p43 = por %p41, %p42
      %p45 = scmp.ne.s32.totalorder %s28, %s44
      %p46 = scmp.eq.s32.totalorder %s20, 0
      %p47 = por %p45, %p46
      %s48 = ssub.s32 %s14, %s21
      %p49 = scmp.eq.s32.totalorder %s48, 0
      %s51 = sadd.s32 %s50, 1
      %s52 = scalar_select %p49, %s50, %s51
      %p55 = pneg %p49
      %p56 = scmp.eq.s32.totalorder %s14, 1
      %p57 = por %p55, %p56
      %p58 = scmp.ne.s32.totalorder %s50, %s53
      %p59 = scmp.eq.s32.totalorder %s14, 0
      %p60 = por %p58, %p59
      %p61 = scmp.ne.s32.totalorder %s50, %s53
      %p62 = scmp.eq.s32.totalorder %s19, 1
      %p63 = por %p61, %p62
      %p64 = scmp.ne.s32.totalorder %s53, %s54
      %p65 = scmp.eq.s32.totalorder %s19, 0
      %p66 = por %p64, %p65
      %p67 = scmp.ne.s32.totalorder %s53, %s54
      %p68 = scmp.eq.s32.totalorder %s20, 1
      %p69 = por %p67, %p68
      %p71 = scmp.ne.s32.totalorder %s54, %s70
      %p72 = scmp.eq.s32.totalorder %s20, 0
      %p73 = por %p71, %p72
      %s75 = sadd.s32 %s74, 1
      %p78 = scmp.eq.s32.totalorder %s14, 1
      %p79 = scmp.ne.s32.totalorder %s74, %s76
      %p80 = scmp.eq.s32.totalorder %s14, 0
      %p81 = por %p79, %p80
      %p82 = scmp.ne.s32.totalorder %s74, %s76
      %p83 = scmp.eq.s32.totalorder %s19, 1
      %p84 = por %p82, %p83
      %p85 = scmp.ne.s32.totalorder %s76, %s77
      %p86 = scmp.eq.s32.totalorder %s19, 0
      %p87 = por %p85, %p86
      %p88 = scmp.ne.s32.totalorder %s76, %s77
      %p89 = scmp.eq.s32.totalorder %s20, 1
      %p90 = por %p88, %p89
      %p92 = scmp.ne.s32.totalorder %s77, %s91
      %p93 = scmp.eq.s32.totalorder %s20, 0
      %p94 = por %p92, %p93
      %s96 = sadd.s32 %s95, 1
      %p99 = scmp.eq.s32.totalorder %s14, 1
      %p100 = scmp.ne.s32.totalorder %s95, %s97
      %p101 = scmp.eq.s32.totalorder %s14, 0
      %p102 = por %p100, %p101
      %p103 = scmp.ne.s32.totalorder %s95, %s97
      %p104 = scmp.eq.s32.totalorder %s19, 1
      %p105 = por %p103, %p104
      %p106 = scmp.ne.s32.totalorder %s97, %s98
      %p107 = scmp.eq.s32.totalorder %s19, 0
      %p108 = por %p106, %p107
      %p109 = scmp.ne.s32.totalorder %s97, %s98
      %p110 = scmp.eq.s32.totalorder %s20, 1
      %p111 = por %p109, %p110
      %p113 = scmp.ne.s32.totalorder %s98, %s112
      %p114 = scmp.eq.s32.totalorder %s20, 0
      %p115 = por %p113, %p114
      %s117 = sadd.s32 %s116, 1
      %p120 = scmp.eq.s32.totalorder %s14, 1
      %p121 = scmp.ne.s32.totalorder %s116, %s118
      %p122 = scmp.eq.s32.totalorder %s14, 0
      %p123 = por %p121, %p122
      %p124 = scmp.ne.s32.totalorder %s116, %s118
      %p125 = scmp.eq.s32.totalorder %s19, 1
      %p126 = por %p124, %p125
      %p127 = scmp.ne.s32.totalorder %s118, %s119
      %p128 = scmp.eq.s32.totalorder %s19, 0
      %p129 = por %p127, %p128
      %p130 = scmp.ne.s32.totalorder %s118, %s119
      %p131 = scmp.eq.s32.totalorder %s20, 1
      %p132 = por %p130, %p131
      %p134 = scmp.ne.s32.totalorder %s119, %s133
      %p135 = scmp.eq.s32.totalorder %s20, 0
      %p136 = por %p134, %p135
      %s137 = ssub.s32 %s14, %s21
      %p138 = scmp.eq.s32.totalorder %s137, 0
      %s140 = sadd.s32 %s139, 1
      %s141 = scalar_select %p138, %s139, %s140
      %p144 = pneg %p138
      %p145 = scmp.eq.s32.totalorder %s14, 1
      %p146 = por %p144, %p145
      %p147 = scmp.ne.s32.totalorder %s139, %s142
      %p148 = scmp.eq.s32.totalorder %s14, 0
      %p149 = por %p147, %p148
      %p150 = scmp.ne.s32.totalorder %s139, %s142
      %p151 = scmp.eq.s32.totalorder %s19, 1
      %p152 = por %p150, %p151
      %p153 = scmp.ne.s32.totalorder %s142, %s143
      %p154 = scmp.eq.s32.totalorder %s19, 0
      %p155 = por %p153, %p154
      %p156 = scmp.ne.s32.totalorder %s142, %s143
      %p157 = scmp.eq.s32.totalorder %s20, 1
      %p158 = por %p156, %p157
      %p160 = scmp.ne.s32.totalorder %s143, %s159
      %p161 = scmp.eq.s32.totalorder %s20, 0
      %p162 = por %p160, %p161
      %p163 = scmp.le.s32.totalorder 1, %s14
      %p164 = scmp.lt.s32.totalorder %s14, 3
      %p165 = pnand %p163, %p164
      %p166 = pneg %p165
      // Predicated region
      $region9: #{multi_head_self_attention.1} parent=5 // pred_check
        _
      $region10: #{multi_head_self_attention.1} parent=5 // pred_check_branch
        %168 = sbr.rel (%p165) target = $region12
      $region11: #{multi_head_self_attention.1} parent=5 // pred_region
        %s169 = ssub.s32 %s14, 1
        // Predicated region
        $region13: #{multi_head_self_attention.1} parent=11 // pred_check
          %p170 = pneg %p87
        $region14: #{multi_head_self_attention.1} parent=11 // pred_check_branch
          %172 = sbr.rel (%p170) target = $region16
        $region15: #{multi_head_self_attention.1} parent=11 // pred_region
          _
        $region16: #{multi_head_self_attention.1} parent=11 // pred_fallthru
          _
        // Predicated region
        $region17: #{multi_head_self_attention.1} parent=11 // pred_check
          %p173 = pneg %p108
        $region18: #{multi_head_self_attention.1} parent=11 // pred_check_branch
          %175 = sbr.rel (%p173) target = $region20
        $region19: #{multi_head_self_attention.1} parent=11 // pred_region
          _
        $region20: #{multi_head_self_attention.1} parent=11 // pred_fallthru
          _
        // Predicated region
        $region21: #{multi_head_self_attention.1} parent=11 // pred_check
          %p176 = pneg %p129
        $region22: #{multi_head_self_attention.1} parent=11 // pred_check_branch
          %178 = sbr.rel (%p176) target = $region24
        $region23: #{multi_head_self_attention.1} parent=11 // pred_region
          _
        $region24: #{multi_head_self_attention.1} parent=11 // pred_fallthru
          _
      $region12: #{multi_head_self_attention.1} parent=5 // pred_fallthru
        _
      %p179 = scmp.lt.s32.totalorder %s14, 2
      // Predicated region
      $region25: #{multi_head_self_attention.1} parent=5 // pred_check
        %p180 = pneg %p179
      $region26: #{multi_head_self_attention.1} parent=5 // pred_check_branch
        %182 = sbr.rel (%p180) target = $region28
      $region27: #{multi_head_self_attention.1} parent=5 // pred_region
        // Predicated region
        $region29: #{multi_head_self_attention.1} parent=27 // pred_check
          %p183 = pneg %p34
        $region30: #{multi_head_self_attention.1} parent=27 // pred_check_branch
          %185 = sbr.rel (%p183) target = $region32
        $region31: #{multi_head_self_attention.1} parent=27 // pred_region
          %p186 = scmp.lt.s32.totalorder %s14, 1
          %s187 = scalar_select %p186, %s14, 1
          %s188 = smul.addr %s187, 4
          %s189 = smul.addr %s188, 8
          %s190 = scalar_lea.vmem %s0, %s189
        $region32: #{multi_head_self_attention.1} parent=27 // pred_fallthru
          _
        // Predicated region
        $region33: #{multi_head_self_attention.1} parent=27 // pred_check
          %p191 = pneg %p60
        $region34: #{multi_head_self_attention.1} parent=27 // pred_check_branch
          %193 = sbr.rel (%p191) target = $region36
        $region35: #{multi_head_self_attention.1} parent=27 // pred_region
          %p194 = scmp.lt.s32.totalorder %s14, 1
          %s195 = scalar_select %p194, %s14, 1
          %s196 = scalar_lea.vmem %s1, %s195
        $region36: #{multi_head_self_attention.1} parent=27 // pred_fallthru
          _
      $region28: #{multi_head_self_attention.1} parent=5 // pred_fallthru
        _
      %p197 = scmp.le.s32.totalorder 1, %s14
      %p198 = scmp.lt.s32.totalorder %s14, 3
      %p199 = pnand %p197, %p198
      %p200 = pneg %p199
      // Predicated region
      $region37: #{multi_head_self_attention.1} parent=5 // pred_check
        _
      $region38: #{multi_head_self_attention.1} parent=5 // pred_check_branch
        %202 = sbr.rel (%p199) target = $region40
      $region39: #{multi_head_self_attention.1} parent=5 // pred_region
        %s203 = ssub.s32 %s14, 1
        %p204 = scmp.lt.s32.totalorder %s19, 1
        %s205 = scalar_select %p204, %s19, 1
        %s206 = smul.addr %s205, 4
        %s207 = smul.addr %s206, 8
        %s208 = scalar_lea.vmem %s0, %s207
        %p209 = pneg %p40
        %p210 = pneg %p37
        %p211 = scmp.lt.s32.totalorder %s19, 1
        %s212 = scalar_select %p211, %s19, 1
        %s213 = scalar_lea.vmem %s1, %s212
        %p214 = pneg %p66
        %p215 = pneg %p63
        %p216 = pneg %p87
        %p217 = pneg %p84
        %p218 = pneg %p108
        %p219 = pneg %p105
        %p220 = pneg %p129
        %p221 = pneg %p126
        %p222 = pneg %p155
        %p223 = pneg %p152
        %s224 = sand.u32 %s142, 1
        %s225 = scalar_lea.sflag [#allocation3], %s224
        %s226 = sand.u32 %s142, 1
        %s227 = smul.addr %s226, 8
        %s228 = scalar_lea.vmem [#allocation2], %s227
        %p229 = scmp.lt.s32.totalorder %s19, 1
        %s230 = scalar_select %p229, %s19, 1
        %s231 = smul.addr %s230, 4
        %s232 = smul.addr %s231, 8
        %s233 = scalar_lea.vmem %s0, %s232
        %p234 = scmp.lt.s32.totalorder %s19, 1
        %s235 = scalar_select %p234, %s19, 1
        %s236 = scalar_lea.vmem %s1, %s235
        %v237 = vld [vmem:[%s233] sm:$0xff]
        %v238 = vld [vmem:[%s233 + $0x8] sm:$0xff]
        %v239 = vld [vmem:[%s233 + $0x10] sm:$0xff]
        %v240 = vld [vmem:[%s233 + $0x18] sm:$0xff]
        %v241 = vld [vmem:[%s2] sm:$0xff]
        %v242 = vld [vmem:[%s2 + $0x8] sm:$0xff]
        %v243 = vld [vmem:[%s2 + $0x10] sm:$0xff]
        %v244 = vld [vmem:[%s2 + $0x18] sm:$0xff]
        %vm245 = vcmask 261120
        %v247 = vsel %vm245, %v237, 0
        %v250 = vsel %vm245, %v238, 0
        %v253 = vsel %vm245, %v239, 0
        %v256 = vsel %vm245, %v240, 0
        %258 = vmatprep.subr.mxu0 0.0
        %259 = vmatpush1.msra.mxu0 %v241
        %260 = vmatprep.subr.mxu0 0.0
        %261 = vmatpush1.msra.mxu0 %v242
        %262 = vmatprep.subr.mxu0 0.0
        %263 = vmatpush1.msra.mxu0 %v243
        %264 = vmatprep.subr.mxu0 0.0
        %265 = vmatpush1.msra.mxu0 %v244
        %266 = vmatprep.subr.mxu0 0.0
        %267 = vmatpush1.msra.mxu0 0.0
        %268 = vmatprep.subr.mxu0 0.0
        %269 = vmatpush1.msra.mxu0 0.0
        %270 = vmatprep.subr.mxu0 0.0
        %271 = vmatpush1.msra.mxu0 0.0
        %272 = vmatprep.subr.mxu0 0.0
        %273 = vmatpush1.msra.mxu0 0.0
        %274 = vmatprep.subr.mxu0 0.0
        %275 = vmatpush1.msra.mxu0 0.0
        %276 = vmatprep.subr.mxu0 0.0
        %277 = vmatpush1.msra.mxu0 0.0
        %278 = vmatprep.subr.mxu0 0.0
        %279 = vmatpush1.msra.mxu0 0.0
        %280 = vmatprep.subr.mxu0 0.0
        %281 = vmatpush1.msra.mxu0 0.0
        %282 = vmatprep.subr.mxu0 0.0
        %283 = vmatpush1.msra.mxu0 0.0
        %284 = vmatprep.subr.mxu0 0.0
        %285 = vmatpush1.msra.mxu0 0.0
        %286 = vmatprep.subr.mxu0 0.0
        %287 = vmatpush1.msra.mxu0 0.0
        %288 = vmatprep.subr.mxu0 0.0
        %289 = vmatpush1.msra.mxu0 0.0
        %290 = vmatprep.subr.mxu0 0.0
        %291 = vmatpush1.msra.mxu0 0.0
        %292 = vmatprep.subr.mxu0 0.0
        %293 = vmatpush1.msra.mxu0 0.0
        %294 = vmatprep.subr.mxu0 0.0
        %295 = vmatpush1.msra.mxu0 0.0
        %296 = vmatprep.subr.mxu0 0.0
        %297 = vmatpush1.msra.mxu0 0.0
        %298 = vmatprep.subr.mxu0 0.0
        %299 = vmatpush1.msra.mxu0 0.0
        %300 = vmatprep.subr.mxu0 0.0
        %301 = vmatpush1.msra.mxu0 0.0
        %302 = vmatprep.subr.mxu0 0.0
        %303 = vmatpush1.msra.mxu0 0.0
        %304 = vmatprep.subr.mxu0 0.0
        %305 = vmatpush1.msra.mxu0 0.0
        %306 = vmatprep.subr.mxu0 0.0
        %307 = vmatpush1.msra.mxu0 0.0
        %308 = vmatprep.subr.mxu0 0.0
        %309 = vmatpush1.msra.mxu0 0.0
        %310 = vmatprep.subr.mxu0 0.0
        %311 = vmatpush1.msra.mxu0 0.0
        %312 = vmatprep.subr.mxu0 0.0
        %313 = vmatpush1.msra.mxu0 0.0
        %314 = vmatprep.subr.mxu0 0.0
        %315 = vmatpush1.msra.mxu0 0.0
        %316 = vmatprep.subr.mxu0 0.0
        %317 = vmatpush1.msra.mxu0 0.0
        %318 = vmatprep.subr.mxu0 0.0
        %319 = vmatpush1.msra.mxu0 0.0
        %320 = vmatprep.subr.mxu0 0.0
        %321 = vmatpush1.msra.mxu0 0.0
        %322 = vmatprep.mubr.f32.mxu0 0.0
        %323 = vmatmul.mubr.f32.gmra.mrb[0].mxu0 %v247
        %v324 = vpop.f32.mrb[0].mxu0
        %v325 = vadd.f32 0.0, %v324
        %v326 = vpop.f32.mrb[0].mxu0
        %327 = vmatprep.mubr.f32.mxu0 0.0
        %328 = vmatmul.mubr.f32.gmra.mrb[0].mxu0 %v250
        %v329 = vpop.f32.mrb[0].mxu0
        %v330 = vadd.f32 0.0, %v329
        %v331 = vpop.f32.mrb[0].mxu0
        %332 = vmatprep.mubr.f32.mxu0 0.0
        %333 = vmatmul.mubr.f32.gmra.mrb[0].mxu0 %v253
        %v334 = vpop.f32.mrb[0].mxu0
        %v335 = vadd.f32 0.0, %v334
        %v336 = vpop.f32.mrb[0].mxu0
        %337 = vmatprep.mubr.f32.mxu0 0.0
        %338 = vmatmul.mubr.f32.gmra.mrb[0].mxu0 %v256
        %v339 = vpop.f32.mrb[0].mxu0
        %v340 = vadd.f32 0.0, %v339
        %v341 = vpop.f32.mrb[0].mxu0
        %342 = vdwg.mxu0
        %v343 = vld [vmem:[%s236] sm:$0x1]
        %v345 = vlaneseq
        %v346 = vshrl.u32 %v345, 7
        %v347 = vsub.s32 0, %v346
        %v348 = vrot.slane %v343, %v347
        %351 = vrot.lane.b32.xlu0 %v325, 96
        %v352 = vpop.permute.xlu0 %351
        %v353 = vsel %vm245, %v325, 0
        %v355 = vsel %vm245, %v352, 0
        %357 = vmatprep.subr.mxu0 0.0
        %358 = vmatpush1.xpose.msra.mxu0 %v355
        %359 = vmatprep.subr.mxu0 0.0
        %360 = vmatpush1.xpose.msra.mxu0 0.0
        %361 = vmatprep.subr.mxu0 0.0
        %362 = vmatpush1.xpose.msra.mxu0 0.0
        %363 = vmatprep.subr.mxu0 0.0
        %364 = vmatpush1.xpose.msra.mxu0 0.0
        %365 = vmatprep.subr.mxu0 0.0
        %366 = vmatpush1.xpose.msra.mxu0 0.0
        %367 = vmatprep.subr.mxu0 0.0
        %368 = vmatpush1.xpose.msra.mxu0 0.0
        %369 = vmatprep.subr.mxu0 0.0
        %370 = vmatpush1.xpose.msra.mxu0 0.0
        %371 = vmatprep.subr.mxu0 0.0
        %372 = vmatpush1.xpose.msra.mxu0 0.0
        %373 = vmatprep.subr.mxu0 0.0
        %374 = vmatpush1.xpose.msra.mxu0 0.0
        %375 = vmatprep.subr.mxu0 0.0
        %376 = vmatpush1.xpose.msra.mxu0 0.0
        %377 = vmatprep.subr.mxu0 0.0
        %378 = vmatpush1.xpose.msra.mxu0 0.0
        %379 = vmatprep.subr.mxu0 0.0
        %380 = vmatpush1.xpose.msra.mxu0 0.0
        %381 = vmatprep.subr.mxu0 0.0
        %382 = vmatpush1.xpose.msra.mxu0 0.0
        %383 = vmatprep.subr.mxu0 0.0
        %384 = vmatpush1.xpose.msra.mxu0 0.0
        %385 = vmatprep.subr.mxu0 0.0
        %386 = vmatpush1.xpose.msra.mxu0 0.0
        %387 = vmatprep.subr.mxu0 0.0
        %388 = vmatpush1.xpose.msra.mxu0 0.0
        %389 = vmatprep.subr.mxu0 0.0
        %390 = vmatpush1.xpose.msra.mxu0 0.0
        %391 = vmatprep.subr.mxu0 0.0
        %392 = vmatpush1.xpose.msra.mxu0 0.0
        %393 = vmatprep.subr.mxu0 0.0
        %394 = vmatpush1.xpose.msra.mxu0 0.0
        %395 = vmatprep.subr.mxu0 0.0
        %396 = vmatpush1.xpose.msra.mxu0 0.0
        %397 = vmatprep.subr.mxu0 0.0
        %398 = vmatpush1.xpose.msra.mxu0 0.0
        %399 = vmatprep.subr.mxu0 0.0
        %400 = vmatpush1.xpose.msra.mxu0 0.0
        %401 = vmatprep.subr.mxu0 0.0
        %402 = vmatpush1.xpose.msra.mxu0 0.0
        %403 = vmatprep.subr.mxu0 0.0
        %404 = vmatpush1.xpose.msra.mxu0 0.0
        %405 = vmatprep.subr.mxu0 0.0
        %406 = vmatpush1.xpose.msra.mxu0 0.0
        %407 = vmatprep.subr.mxu0 0.0
        %408 = vmatpush1.xpose.msra.mxu0 0.0
        %409 = vmatprep.subr.mxu0 0.0
        %410 = vmatpush1.xpose.msra.mxu0 0.0
        %411 = vmatprep.subr.mxu0 0.0
        %412 = vmatpush1.xpose.msra.mxu0 0.0
        %413 = vmatprep.subr.mxu0 0.0
        %414 = vmatpush1.xpose.msra.mxu0 0.0
        %415 = vmatprep.subr.mxu0 0.0
        %416 = vmatpush1.xpose.msra.mxu0 0.0
        %417 = vmatprep.subr.mxu0 0.0
        %418 = vmatpush1.xpose.msra.mxu0 0.0
        %419 = vmatprep.subr.mxu0 0.0
        %420 = vmatpush1.xpose.msra.mxu0 0.0
        %421 = vmatprep.mubr.f32.mxu0 0.0
        %422 = vmatmul.mubr.f32.gmra.mrb[0].mxu0 %v353
        %v423 = vpop.f32.mrb[0].mxu0
        %v424 = vadd.f32 %v348, %v423
        %v425 = vpop.f32.mrb[0].mxu0
        %426 = vdwg.mxu0
        %428 = vrot.lane.b32.xlu0 %v330, 96
        %v429 = vpop.permute.xlu0 %428
        %v430 = vsel %vm245, %v330, 0
        %v432 = vsel %vm245, %v429, 0
        %434 = vmatprep.subr.mxu0 0.0
        %435 = vmatpush1.xpose.msra.mxu0 %v432
        %436 = vmatprep.subr.mxu0 0.0
        %437 = vmatpush1.xpose.msra.mxu0 0.0
        %438 = vmatprep.subr.mxu0 0.0
        %439 = vmatpush1.xpose.msra.mxu0 0.0
        %440 = vmatprep.subr.mxu0 0.0
        %441 = vmatpush1.xpose.msra.mxu0 0.0
        %442 = vmatprep.subr.mxu0 0.0
        %443 = vmatpush1.xpose.msra.mxu0 0.0
        %444 = vmatprep.subr.mxu0 0.0
        %445 = vmatpush1.xpose.msra.mxu0 0.0
        %446 = vmatprep.subr.mxu0 0.0
        %447 = vmatpush1.xpose.msra.mxu0 0.0
        %448 = vmatprep.subr.mxu0 0.0
        %449 = vmatpush1.xpose.msra.mxu0 0.0
        %450 = vmatprep.subr.mxu0 0.0
        %451 = vmatpush1.xpose.msra.mxu0 0.0
        %452 = vmatprep.subr.mxu0 0.0
        %453 = vmatpush1.xpose.msra.mxu0 0.0
        %454 = vmatprep.subr.mxu0 0.0
        %455 = vmatpush1.xpose.msra.mxu0 0.0
        %456 = vmatprep.subr.mxu0 0.0
        %457 = vmatpush1.xpose.msra.mxu0 0.0
        %458 = vmatprep.subr.mxu0 0.0
        %459 = vmatpush1.xpose.msra.mxu0 0.0
        %460 = vmatprep.subr.mxu0 0.0
        %461 = vmatpush1.xpose.msra.mxu0 0.0
        %462 = vmatprep.subr.mxu0 0.0
        %463 = vmatpush1.xpose.msra.mxu0 0.0
        %464 = vmatprep.subr.mxu0 0.0
        %465 = vmatpush1.xpose.msra.mxu0 0.0
        %466 = vmatprep.subr.mxu0 0.0
        %467 = vmatpush1.xpose.msra.mxu0 0.0
        %468 = vmatprep.subr.mxu0 0.0
        %469 = vmatpush1.xpose.msra.mxu0 0.0
        %470 = vmatprep.subr.mxu0 0.0
        %471 = vmatpush1.xpose.msra.mxu0 0.0
        %472 = vmatprep.subr.mxu0 0.0
        %473 = vmatpush1.xpose.msra.mxu0 0.0
        %474 = vmatprep.subr.mxu0 0.0
        %475 = vmatpush1.xpose.msra.mxu0 0.0
        %476 = vmatprep.subr.mxu0 0.0
        %477 = vmatpush1.xpose.msra.mxu0 0.0
        %478 = vmatprep.subr.mxu0 0.0
        %479 = vmatpush1.xpose.msra.mxu0 0.0
        %480 = vmatprep.subr.mxu0 0.0
        %481 = vmatpush1.xpose.msra.mxu0 0.0
        %482 = vmatprep.subr.mxu0 0.0
        %483 = vmatpush1.xpose.msra.mxu0 0.0
        %484 = vmatprep.subr.mxu0 0.0
        %485 = vmatpush1.xpose.msra.mxu0 0.0
        %486 = vmatprep.subr.mxu0 0.0
        %487 = vmatpush1.xpose.msra.mxu0 0.0
        %488 = vmatprep.subr.mxu0 0.0
        %489 = vmatpush1.xpose.msra.mxu0 0.0
        %490 = vmatprep.subr.mxu0 0.0
        %491 = vmatpush1.xpose.msra.mxu0 0.0
        %492 = vmatprep.subr.mxu0 0.0
        %493 = vmatpush1.xpose.msra.mxu0 0.0
        %494 = vmatprep.subr.mxu0 0.0
        %495 = vmatpush1.xpose.msra.mxu0 0.0
        %496 = vmatprep.subr.mxu0 0.0
        %497 = vmatpush1.xpose.msra.mxu0 0.0
        %498 = vmatprep.mubr.f32.mxu0 0.0
        %499 = vmatmul.mubr.f32.gmra.mrb[0].mxu0 %v430
        %v500 = vpop.f32.mrb[0].mxu0
        %v501 = vadd.f32 %v348, %v500
        %v502 = vpop.f32.mrb[0].mxu0
        %503 = vdwg.mxu0
        %505 = vrot.lane.b32.xlu0 %v335, 96
        %v506 = vpop.permute.xlu0 %505
        %v507 = vsel %vm245, %v335, 0
        %v509 = vsel %vm245, %v506, 0
        %511 = vmatprep.subr.mxu0 0.0
        %512 = vmatpush1.xpose.msra.mxu0 %v509
        %513 = vmatprep.subr.mxu0 0.0
        %514 = vmatpush1.xpose.msra.mxu0 0.0
        %515 = vmatprep.subr.mxu0 0.0
        %516 = vmatpush1.xpose.msra.mxu0 0.0
        %517 = vmatprep.subr.mxu0 0.0
        %518 = vmatpush1.xpose.msra.mxu0 0.0
        %519 = vmatprep.subr.mxu0 0.0
        %520 = vmatpush1.xpose.msra.mxu0 0.0
        %521 = vmatprep.subr.mxu0 0.0
        %522 = vmatpush1.xpose.msra.mxu0 0.0
        %523 = vmatprep.subr.mxu0 0.0
        %524 = vmatpush1.xpose.msra.mxu0 0.0
        %525 = vmatprep.subr.mxu0 0.0
        %526 = vmatpush1.xpose.msra.mxu0 0.0
        %527 = vmatprep.subr.mxu0 0.0
        %528 = vmatpush1.xpose.msra.mxu0 0.0
        %529 = vmatprep.subr.mxu0 0.0
        %530 = vmatpush1.xpose.msra.mxu0 0.0
        %531 = vmatprep.subr.mxu0 0.0
        %532 = vmatpush1.xpose.msra.mxu0 0.0
        %533 = vmatprep.subr.mxu0 0.0
        %534 = vmatpush1.xpose.msra.mxu0 0.0
        %535 = vmatprep.subr.mxu0 0.0
        %536 = vmatpush1.xpose.msra.mxu0 0.0
        %537 = vmatprep.subr.mxu0 0.0
        %538 = vmatpush1.xpose.msra.mxu0 0.0
        %539 = vmatprep.subr.mxu0 0.0
        %540 = vmatpush1.xpose.msra.mxu0 0.0
        %541 = vmatprep.subr.mxu0 0.0
        %542 = vmatpush1.xpose.msra.mxu0 0.0
        %543 = vmatprep.subr.mxu0 0.0
        %544 = vmatpush1.xpose.msra.mxu0 0.0
        %545 = vmatprep.subr.mxu0 0.0
        %546 = vmatpush1.xpose.msra.mxu0 0.0
        %547 = vmatprep.subr.mxu0 0.0
        %548 = vmatpush1.xpose.msra.mxu0 0.0
        %549 = vmatprep.subr.mxu0 0.0
        %550 = vmatpush1.xpose.msra.mxu0 0.0
        %551 = vmatprep.subr.mxu0 0.0
        %552 = vmatpush1.xpose.msra.mxu0 0.0
        %553 = vmatprep.subr.mxu0 0.0
        %554 = vmatpush1.xpose.msra.mxu0 0.0
        %555 = vmatprep.subr.mxu0 0.0
        %556 = vmatpush1.xpose.msra.mxu0 0.0
        %557 = vmatprep.subr.mxu0 0.0
        %558 = vmatpush1.xpose.msra.mxu0 0.0
        %559 = vmatprep.subr.mxu0 0.0
        %560 = vmatpush1.xpose.msra.mxu0 0.0
        %561 = vmatprep.subr.mxu0 0.0
        %562 = vmatpush1.xpose.msra.mxu0 0.0
        %563 = vmatprep.subr.mxu0 0.0
        %564 = vmatpush1.xpose.msra.mxu0 0.0
        %565 = vmatprep.subr.mxu0 0.0
        %566 = vmatpush1.xpose.msra.mxu0 0.0
        %567 = vmatprep.subr.mxu0 0.0
        %568 = vmatpush1.xpose.msra.mxu0 0.0
        %569 = vmatprep.subr.mxu0 0.0
        %570 = vmatpush1.xpose.msra.mxu0 0.0
        %571 = vmatprep.subr.mxu0 0.0
        %572 = vmatpush1.xpose.msra.mxu0 0.0
        %573 = vmatprep.subr.mxu0 0.0
        %574 = vmatpush1.xpose.msra.mxu0 0.0
        %575 = vmatprep.mubr.f32.mxu0 0.0
        %576 = vmatmul.mubr.f32.gmra.mrb[0].mxu0 %v507
        %v577 = vpop.f32.mrb[0].mxu0
        %v578 = vadd.f32 %v348, %v577
        %v579 = vpop.f32.mrb[0].mxu0
        %580 = vdwg.mxu0
        %582 = vrot.lane.b32.xlu0 %v340, 96
        %v583 = vpop.permute.xlu0 %582
        %v584 = vsel %vm245, %v340, 0
        %v586 = vsel %vm245, %v583, 0
        %588 = vmatprep.subr.mxu0 0.0
        %589 = vmatpush1.xpose.msra.mxu0 %v586
        %590 = vmatprep.subr.mxu0 0.0
        %591 = vmatpush1.xpose.msra.mxu0 0.0
        %592 = vmatprep.subr.mxu0 0.0
        %593 = vmatpush1.xpose.msra.mxu0 0.0
        %594 = vmatprep.subr.mxu0 0.0
        %595 = vmatpush1.xpose.msra.mxu0 0.0
        %596 = vmatprep.subr.mxu0 0.0
        %597 = vmatpush1.xpose.msra.mxu0 0.0
        %598 = vmatprep.subr.mxu0 0.0
        %599 = vmatpush1.xpose.msra.mxu0 0.0
        %600 = vmatprep.subr.mxu0 0.0
        %601 = vmatpush1.xpose.msra.mxu0 0.0
        %602 = vmatprep.subr.mxu0 0.0
        %603 = vmatpush1.xpose.msra.mxu0 0.0
        %604 = vmatprep.subr.mxu0 0.0
        %605 = vmatpush1.xpose.msra.mxu0 0.0
        %606 = vmatprep.subr.mxu0 0.0
        %607 = vmatpush1.xpose.msra.mxu0 0.0
        %608 = vmatprep.subr.mxu0 0.0
        %609 = vmatpush1.xpose.msra.mxu0 0.0
        %610 = vmatprep.subr.mxu0 0.0
        %611 = vmatpush1.xpose.msra.mxu0 0.0
        %612 = vmatprep.subr.mxu0 0.0
        %613 = vmatpush1.xpose.msra.mxu0 0.0
        %614 = vmatprep.subr.mxu0 0.0
        %615 = vmatpush1.xpose.msra.mxu0 0.0
        %616 = vmatprep.subr.mxu0 0.0
        %617 = vmatpush1.xpose.msra.mxu0 0.0
        %618 = vmatprep.subr.mxu0 0.0
        %619 = vmatpush1.xpose.msra.mxu0 0.0
        %620 = vmatprep.subr.mxu0 0.0
        %621 = vmatpush1.xpose.msra.mxu0 0.0
        %622 = vmatprep.subr.mxu0 0.0
        %623 = vmatpush1.xpose.msra.mxu0 0.0
        %624 = vmatprep.subr.mxu0 0.0
        %625 = vmatpush1.xpose.msra.mxu0 0.0
        %626 = vmatprep.subr.mxu0 0.0
        %627 = vmatpush1.xpose.msra.mxu0 0.0
        %628 = vmatprep.subr.mxu0 0.0
        %629 = vmatpush1.xpose.msra.mxu0 0.0
        %630 = vmatprep.subr.mxu0 0.0
        %631 = vmatpush1.xpose.msra.mxu0 0.0
        %632 = vmatprep.subr.mxu0 0.0
        %633 = vmatpush1.xpose.msra.mxu0 0.0
        %634 = vmatprep.subr.mxu0 0.0
        %635 = vmatpush1.xpose.msra.mxu0 0.0
        %636 = vmatprep.subr.mxu0 0.0
        %637 = vmatpush1.xpose.msra.mxu0 0.0
        %638 = vmatprep.subr.mxu0 0.0
        %639 = vmatpush1.xpose.msra.mxu0 0.0
        %640 = vmatprep.subr.mxu0 0.0
        %641 = vmatpush1.xpose.msra.mxu0 0.0
        %642 = vmatprep.subr.mxu0 0.0
        %643 = vmatpush1.xpose.msra.mxu0 0.0
        %644 = vmatprep.subr.mxu0 0.0
        %645 = vmatpush1.xpose.msra.mxu0 0.0
        %646 = vmatprep.subr.mxu0 0.0
        %647 = vmatpush1.xpose.msra.mxu0 0.0
        %648 = vmatprep.subr.mxu0 0.0
        %649 = vmatpush1.xpose.msra.mxu0 0.0
        %650 = vmatprep.subr.mxu0 0.0
        %651 = vmatpush1.xpose.msra.mxu0 0.0
        %652 = vmatprep.mubr.f32.mxu0 0.0
        %653 = vmatmul.mubr.f32.gmra.mrb[0].mxu0 %v584
        %v654 = vpop.f32.mrb[0].mxu0
        %v655 = vadd.f32 %v348, %v654
        %v656 = vpop.f32.mrb[0].mxu0
        %657 = vdwg.mxu0
        %vm658 = vcmask 64512
        %v659 = vsel %vm658, %v424, -inf
        %660 = vmax.xlane.f32.xlu0 %v659
        %v661 = vpop.xlane.xlu0 %660
        %v662 = vsel %vm658, %v501, -inf
        %663 = vmax.xlane.f32.xlu0 %v662
        %v664 = vpop.xlane.xlu0 %663
        %v665 = vsel %vm658, %v578, -inf
        %666 = vmax.xlane.f32.xlu0 %v665
        %v667 = vpop.xlane.xlu0 %666
        %v668 = vsel %vm658, %v655, -inf
        %669 = vmax.xlane.f32.xlu0 %v668
        %v670 = vpop.xlane.xlu0 %669
        %v671 = vsub.f32 %v424, %v661
        %v672 = vsub.f32 %v501, %v664
        %v673 = vsub.f32 %v578, %v667
        %v674 = vsub.f32 %v655, %v670
        %v675 = vmul.f32 %v671, 1.442695
        %v676 = vpow.pop %v675
        %v677 = vmul.f32 %v672, 1.442695
        %v678 = vpow.pop %v677
        %v679 = vmul.f32 %v673, 1.442695
        %v680 = vpow.pop %v679
        %v681 = vmul.f32 %v674, 1.442695
        %v682 = vpow.pop %v681
        %v683 = vsel %vm658, %v676, 0.0
        %684 = vadd.xlane.f32.xlu0 %v683
        %v685 = vpop.xlane.xlu0 %684
        %v686 = vsel %vm658, %v678, 0.0
        %687 = vadd.xlane.f32.xlu0 %v686
        %v688 = vpop.xlane.xlu0 %687
        %v689 = vsel %vm658, %v680, 0.0
        %690 = vadd.xlane.f32.xlu0 %v689
        %v691 = vpop.xlane.xlu0 %690
        %v692 = vsel %vm658, %v682, 0.0
        %693 = vadd.xlane.f32.xlu0 %v692
        %v694 = vpop.xlane.xlu0 %693
        %v695 = vrcp.pop %v685
        %v696 = vmul.f32 %v676, %v695
        %v697 = vrcp.pop %v688
        %v698 = vmul.f32 %v678, %v697
        %v699 = vrcp.pop %v691
        %v700 = vmul.f32 %v680, %v699
        %v701 = vrcp.pop %v694
        %v702 = vmul.f32 %v682, %v701
        %703 = vrot.lane.b32.xlu0 %v325, 64
        %v704 = vpop.permute.xlu0 %703
        %v707 = vsel %vm658, %v696, 0
        %709 = vmatprep.subr.mxu0 0.0
        %710 = vmatpush1.msra.mxu0 %v704
        %711 = vmatprep.subr.mxu0 0.0
        %712 = vmatpush1.msra.mxu0 0.0
        %713 = vmatprep.subr.mxu0 0.0
        %714 = vmatpush1.msra.mxu0 0.0
        %715 = vmatprep.subr.mxu0 0.0
        %716 = vmatpush1.msra.mxu0 0.0
        %717 = vmatprep.subr.mxu0 0.0
        %718 = vmatpush1.msra.mxu0 0.0
        %719 = vmatprep.subr.mxu0 0.0
        %720 = vmatpush1.msra.mxu0 0.0
        %721 = vmatprep.subr.mxu0 0.0
        %722 = vmatpush1.msra.mxu0 0.0
        %723 = vmatprep.subr.mxu0 0.0
        %724 = vmatpush1.msra.mxu0 0.0
        %725 = vmatprep.subr.mxu0 0.0
        %726 = vmatpush1.msra.mxu0 0.0
        %727 = vmatprep.subr.mxu0 0.0
        %728 = vmatpush1.msra.mxu0 0.0
        %729 = vmatprep.subr.mxu0 0.0
        %730 = vmatpush1.msra.mxu0 0.0
        %731 = vmatprep.subr.mxu0 0.0
        %732 = vmatpush1.msra.mxu0 0.0
        %733 = vmatprep.subr.mxu0 0.0
        %734 = vmatpush1.msra.mxu0 0.0
        %735 = vmatprep.subr.mxu0 0.0
        %736 = vmatpush1.msra.mxu0 0.0
        %737 = vmatprep.subr.mxu0 0.0
        %738 = vmatpush1.msra.mxu0 0.0
        %739 = vmatprep.subr.mxu0 0.0
        %740 = vmatpush1.msra.mxu0 0.0
        %741 = vmatprep.subr.mxu0 0.0
        %742 = vmatpush1.msra.mxu0 0.0
        %743 = vmatprep.subr.mxu0 0.0
        %744 = vmatpush1.msra.mxu0 0.0
        %745 = vmatprep.subr.mxu0 0.0
        %746 = vmatpush1.msra.mxu0 0.0
        %747 = vmatprep.subr.mxu0 0.0
        %748 = vmatpush1.msra.mxu0 0.0
        %749 = vmatprep.subr.mxu0 0.0
        %750 = vmatpush1.msra.mxu0 0.0
        %751 = vmatprep.subr.mxu0 0.0
        %752 = vmatpush1.msra.mxu0 0.0
        %753 = vmatprep.subr.mxu0 0.0
        %754 = vmatpush1.msra.mxu0 0.0
        %755 = vmatprep.subr.mxu0 0.0
        %756 = vmatpush1.msra.mxu0 0.0
        %757 = vmatprep.subr.mxu0 0.0
        %758 = vmatpush1.msra.mxu0 0.0
        %759 = vmatprep.subr.mxu0 0.0
        %760 = vmatpush1.msra.mxu0 0.0
        %761 = vmatprep.subr.mxu0 0.0
        %762 = vmatpush1.msra.mxu0 0.0
        %763 = vmatprep.subr.mxu0 0.0
        %764 = vmatpush1.msra.mxu0 0.0
        %765 = vmatprep.subr.mxu0 0.0
        %766 = vmatpush1.msra.mxu0 0.0
        %767 = vmatprep.subr.mxu0 0.0
        %768 = vmatpush1.msra.mxu0 0.0
        %769 = vmatprep.subr.mxu0 0.0
        %770 = vmatpush1.msra.mxu0 0.0
        %771 = vmatprep.subr.mxu0 0.0
        %772 = vmatpush1.msra.mxu0 0.0
        %773 = vmatprep.mubr.f32.mxu0 0.0
        %774 = vmatmul.mubr.f32.gmra.mrb[0].mxu0 %v707
        %v775 = vpop.f32.mrb[0].mxu0
        %v776 = vadd.f32 0.0, %v775
        %v777 = vpop.f32.mrb[0].mxu0
        %778 = vdwg.mxu0
        %779 = vrot.lane.b32.xlu0 %v330, 64
        %v780 = vpop.permute.xlu0 %779
        %v783 = vsel %vm658, %v698, 0
        %785 = vmatprep.subr.mxu0 0.0
        %786 = vmatpush1.msra.mxu0 %v780
        %787 = vmatprep.subr.mxu0 0.0
        %788 = vmatpush1.msra.mxu0 0.0
        %789 = vmatprep.subr.mxu0 0.0
        %790 = vmatpush1.msra.mxu0 0.0
        %791 = vmatprep.subr.mxu0 0.0
        %792 = vmatpush1.msra.mxu0 0.0
        %793 = vmatprep.subr.mxu0 0.0
        %794 = vmatpush1.msra.mxu0 0.0
        %795 = vmatprep.subr.mxu0 0.0
        %796 = vmatpush1.msra.mxu0 0.0
        %797 = vmatprep.subr.mxu0 0.0
        %798 = vmatpush1.msra.mxu0 0.0
        %799 = vmatprep.subr.mxu0 0.0
        %800 = vmatpush1.msra.mxu0 0.0
        %801 = vmatprep.subr.mxu0 0.0
        %802 = vmatpush1.msra.mxu0 0.0
        %803 = vmatprep.subr.mxu0 0.0
        %804 = vmatpush1.msra.mxu0 0.0
        %805 = vmatprep.subr.mxu0 0.0
        %806 = vmatpush1.msra.mxu0 0.0
        %807 = vmatprep.subr.mxu0 0.0
        %808 = vmatpush1.msra.mxu0 0.0
        %809 = vmatprep.subr.mxu0 0.0
        %810 = vmatpush1.msra.mxu0 0.0
        %811 = vmatprep.subr.mxu0 0.0
        %812 = vmatpush1.msra.mxu0 0.0
        %813 = vmatprep.subr.mxu0 0.0
        %814 = vmatpush1.msra.mxu0 0.0
        %815 = vmatprep.subr.mxu0 0.0
        %816 = vmatpush1.msra.mxu0 0.0
        %817 = vmatprep.subr.mxu0 0.0
        %818 = vmatpush1.msra.mxu0 0.0
        %819 = vmatprep.subr.mxu0 0.0
        %820 = vmatpush1.msra.mxu0 0.0
        %821 = vmatprep.subr.mxu0 0.0
        %822 = vmatpush1.msra.mxu0 0.0
        %823 = vmatprep.subr.mxu0 0.0
        %824 = vmatpush1.msra.mxu0 0.0
        %825 = vmatprep.subr.mxu0 0.0
        %826 = vmatpush1.msra.mxu0 0.0
        %827 = vmatprep.subr.mxu0 0.0
        %828 = vmatpush1.msra.mxu0 0.0
        %829 = vmatprep.subr.mxu0 0.0
        %830 = vmatpush1.msra.mxu0 0.0
        %831 = vmatprep.subr.mxu0 0.0
        %832 = vmatpush1.msra.mxu0 0.0
        %833 = vmatprep.subr.mxu0 0.0
        %834 = vmatpush1.msra.mxu0 0.0
        %835 = vmatprep.subr.mxu0 0.0
        %836 = vmatpush1.msra.mxu0 0.0
        %837 = vmatprep.subr.mxu0 0.0
        %838 = vmatpush1.msra.mxu0 0.0
        %839 = vmatprep.subr.mxu0 0.0
        %840 = vmatpush1.msra.mxu0 0.0
        %841 = vmatprep.subr.mxu0 0.0
        %842 = vmatpush1.msra.mxu0 0.0
        %843 = vmatprep.subr.mxu0 0.0
        %844 = vmatpush1.msra.mxu0 0.0
        %845 = vmatprep.subr.mxu0 0.0
        %846 = vmatpush1.msra.mxu0 0.0
        %847 = vmatprep.subr.mxu0 0.0
        %848 = vmatpush1.msra.mxu0 0.0
        %849 = vmatprep.mubr.f32.mxu0 0.0
        %850 = vmatmul.mubr.f32.gmra.mrb[0].mxu0 %v783
        %v851 = vpop.f32.mrb[0].mxu0
        %v852 = vadd.f32 0.0, %v851
        %v853 = vpop.f32.mrb[0].mxu0
        %854 = vdwg.mxu0
        %855 = vrot.lane.b32.xlu0 %v335, 64
        %v856 = vpop.permute.xlu0 %855
        %v859 = vsel %vm658, %v700, 0
        %861 = vmatprep.subr.mxu0 0.0
        %862 = vmatpush1.msra.mxu0 %v856
        %863 = vmatprep.subr.mxu0 0.0
        %864 = vmatpush1.msra.mxu0 0.0
        %865 = vmatprep.subr.mxu0 0.0
        %866 = vmatpush1.msra.mxu0 0.0
        %867 = vmatprep.subr.mxu0 0.0
        %868 = vmatpush1.msra.mxu0 0.0
        %869 = vmatprep.subr.mxu0 0.0
        %870 = vmatpush1.msra.mxu0 0.0
        %871 = vmatprep.subr.mxu0 0.0
        %872 = vmatpush1.msra.mxu0 0.0
        %873 = vmatprep.subr.mxu0 0.0
        %874 = vmatpush1.msra.mxu0 0.0
        %875 = vmatprep.subr.mxu0 0.0
        %876 = vmatpush1.msra.mxu0 0.0
        %877 = vmatprep.subr.mxu0 0.0
        %878 = vmatpush1.msra.mxu0 0.0
        %879 = vmatprep.subr.mxu0 0.0
        %880 = vmatpush1.msra.mxu0 0.0
        %881 = vmatprep.subr.mxu0 0.0
        %882 = vmatpush1.msra.mxu0 0.0
        %883 = vmatprep.subr.mxu0 0.0
        %884 = vmatpush1.msra.mxu0 0.0
        %885 = vmatprep.subr.mxu0 0.0
        %886 = vmatpush1.msra.mxu0 0.0
        %887 = vmatprep.subr.mxu0 0.0
        %888 = vmatpush1.msra.mxu0 0.0
        %889 = vmatprep.subr.mxu0 0.0
        %890 = vmatpush1.msra.mxu0 0.0
        %891 = vmatprep.subr.mxu0 0.0
        %892 = vmatpush1.msra.mxu0 0.0
        %893 = vmatprep.subr.mxu0 0.0
        %894 = vmatpush1.msra.mxu0 0.0
        %895 = vmatprep.subr.mxu0 0.0
        %896 = vmatpush1.msra.mxu0 0.0
        %897 = vmatprep.subr.mxu0 0.0
        %898 = vmatpush1.msra.mxu0 0.0
        %899 = vmatprep.subr.mxu0 0.0
        %900 = vmatpush1.msra.mxu0 0.0
        %901 = vmatprep.subr.mxu0 0.0
        %902 = vmatpush1.msra.mxu0 0.0
        %903 = vmatprep.subr.mxu0 0.0
        %904 = vmatpush1.msra.mxu0 0.0
        %905 = vmatprep.subr.mxu0 0.0
        %906 = vmatpush1.msra.mxu0 0.0
        %907 = vmatprep.subr.mxu0 0.0
        %908 = vmatpush1.msra.mxu0 0.0
        %909 = vmatprep.subr.mxu0 0.0
        %910 = vmatpush1.msra.mxu0 0.0
        %911 = vmatprep.subr.mxu0 0.0
        %912 = vmatpush1.msra.mxu0 0.0
        %913 = vmatprep.subr.mxu0 0.0
        %914 = vmatpush1.msra.mxu0 0.0
        %915 = vmatprep.subr.mxu0 0.0
        %916 = vmatpush1.msra.mxu0 0.0
        %917 = vmatprep.subr.mxu0 0.0
        %918 = vmatpush1.msra.mxu0 0.0
        %919 = vmatprep.subr.mxu0 0.0
        %920 = vmatpush1.msra.mxu0 0.0
        %921 = vmatprep.subr.mxu0 0.0
        %922 = vmatpush1.msra.mxu0 0.0
        %923 = vmatprep.subr.mxu0 0.0
        %924 = vmatpush1.msra.mxu0 0.0
        %925 = vmatprep.mubr.f32.mxu0 0.0
        %926 = vmatmul.mubr.f32.gmra.mrb[0].mxu0 %v859
        %v927 = vpop.f32.mrb[0].mxu0
        %v928 = vadd.f32 0.0, %v927
        %v929 = vpop.f32.mrb[0].mxu0
        %930 = vdwg.mxu0
        %931 = vrot.lane.b32.xlu0 %v340, 64
        %v932 = vpop.permute.xlu0 %931
        %v935 = vsel %vm658, %v702, 0
        %937 = vmatprep.subr.mxu0 0.0
        %938 = vmatpush1.msra.mxu0 %v932
        %939 = vmatprep.subr.mxu0 0.0
        %940 = vmatpush1.msra.mxu0 0.0
        %941 = vmatprep.subr.mxu0 0.0
        %942 = vmatpush1.msra.mxu0 0.0
        %943 = vmatprep.subr.mxu0 0.0
        %944 = vmatpush1.msra.mxu0 0.0
        %945 = vmatprep.subr.mxu0 0.0
        %946 = vmatpush1.msra.mxu0 0.0
        %947 = vmatprep.subr.mxu0 0.0
        %948 = vmatpush1.msra.mxu0 0.0
        %949 = vmatprep.subr.mxu0 0.0
        %950 = vmatpush1.msra.mxu0 0.0
        %951 = vmatprep.subr.mxu0 0.0
        %952 = vmatpush1.msra.mxu0 0.0
        %953 = vmatprep.subr.mxu0 0.0
        %954 = vmatpush1.msra.mxu0 0.0
        %955 = vmatprep.subr.mxu0 0.0
        %956 = vmatpush1.msra.mxu0 0.0
        %957 = vmatprep.subr.mxu0 0.0
        %958 = vmatpush1.msra.mxu0 0.0
        %959 = vmatprep.subr.mxu0 0.0
        %960 = vmatpush1.msra.mxu0 0.0
        %961 = vmatprep.subr.mxu0 0.0
        %962 = vmatpush1.msra.mxu0 0.0
        %963 = vmatprep.subr.mxu0 0.0
        %964 = vmatpush1.msra.mxu0 0.0
        %965 = vmatprep.subr.mxu0 0.0
        %966 = vmatpush1.msra.mxu0 0.0
        %967 = vmatprep.subr.mxu0 0.0
        %968 = vmatpush1.msra.mxu0 0.0
        %969 = vmatprep.subr.mxu0 0.0
        %970 = vmatpush1.msra.mxu0 0.0
        %971 = vmatprep.subr.mxu0 0.0
        %972 = vmatpush1.msra.mxu0 0.0
        %973 = vmatprep.subr.mxu0 0.0
        %974 = vmatpush1.msra.mxu0 0.0
        %975 = vmatprep.subr.mxu0 0.0
        %976 = vmatpush1.msra.mxu0 0.0
        %977 = vmatprep.subr.mxu0 0.0
        %978 = vmatpush1.msra.mxu0 0.0
        %979 = vmatprep.subr.mxu0 0.0
        %980 = vmatpush1.msra.mxu0 0.0
        %981 = vmatprep.subr.mxu0 0.0
        %982 = vmatpush1.msra.mxu0 0.0
        %983 = vmatprep.subr.mxu0 0.0
        %984 = vmatpush1.msra.mxu0 0.0
        %985 = vmatprep.subr.mxu0 0.0
        %986 = vmatpush1.msra.mxu0 0.0
        %987 = vmatprep.subr.mxu0 0.0
        %988 = vmatpush1.msra.mxu0 0.0
        %989 = vmatprep.subr.mxu0 0.0
        %990 = vmatpush1.msra.mxu0 0.0
        %991 = vmatprep.subr.mxu0 0.0
        %992 = vmatpush1.msra.mxu0 0.0
        %993 = vmatprep.subr.mxu0 0.0
        %994 = vmatpush1.msra.mxu0 0.0
        %995 = vmatprep.subr.mxu0 0.0
        %996 = vmatpush1.msra.mxu0 0.0
        %997 = vmatprep.subr.mxu0 0.0
        %998 = vmatpush1.msra.mxu0 0.0
        %999 = vmatprep.subr.mxu0 0.0
        %1000 = vmatpush1.msra.mxu0 0.0
        %1001 = vmatprep.mubr.f32.mxu0 0.0
        %1002 = vmatmul.mubr.f32.gmra.mrb[0].mxu0 %v935
        %v1003 = vpop.f32.mrb[0].mxu0
        %v1004 = vadd.f32 0.0, %v1003
        %v1005 = vpop.f32.mrb[0].mxu0
        %1006 = vdwg.mxu0
        %v1007 = vld [vmem:[%s3] sm:$0xff]
        %v1008 = vld [vmem:[%s3 + $0x8] sm:$0xff]
        %v1009 = vld [vmem:[%s3 + $0x10] sm:$0xff]
        %v1010 = vld [vmem:[%s3 + $0x18] sm:$0xff]
        %v1011 = vld [vmem:[%s3 + $0x20] sm:$0xff]
        %v1012 = vld [vmem:[%s3 + $0x28] sm:$0xff]
        %v1013 = vld [vmem:[%s3 + $0x30] sm:$0xff]
        %v1014 = vld [vmem:[%s3 + $0x38] sm:$0xff]
        %v1015 = vld [vmem:[%s3 + $0x40] sm:$0xff]
        %v1016 = vld [vmem:[%s3 + $0x48] sm:$0xff]
        %v1017 = vld [vmem:[%s3 + $0x50] sm:$0xff]
        %v1018 = vld [vmem:[%s3 + $0x58] sm:$0xff]
        %v1019 = vld [vmem:[%s3 + $0x60] sm:$0xff]
        %v1020 = vld [vmem:[%s3 + $0x68] sm:$0xff]
        %v1021 = vld [vmem:[%s3 + $0x70] sm:$0xff]
        %v1022 = vld [vmem:[%s3 + $0x78] sm:$0xff]
        %v1024 = vsel %vm245, %v776, 0
        %1026 = vmatprep.subr.mxu0 0.0
        %1027 = vmatpush1.msra.mxu0 %v1007
        %1028 = vmatprep.subr.mxu0 0.0
        %1029 = vmatpush1.msra.mxu0 %v1008
        %1030 = vmatprep.subr.mxu0 0.0
        %1031 = vmatpush1.msra.mxu0 %v1009
        %1032 = vmatprep.subr.mxu0 0.0
        %1033 = vmatpush1.msra.mxu0 %v1010
        %1034 = vmatprep.subr.mxu0 0.0
        %1035 = vmatpush1.msra.mxu0 0.0
        %1036 = vmatprep.subr.mxu0 0.0
        %1037 = vmatpush1.msra.mxu0 0.0
        %1038 = vmatprep.subr.mxu0 0.0
        %1039 = vmatpush1.msra.mxu0 0.0
        %1040 = vmatprep.subr.mxu0 0.0
        %1041 = vmatpush1.msra.mxu0 0.0
        %1042 = vmatprep.subr.mxu0 0.0
        %1043 = vmatpush1.msra.mxu0 0.0
        %1044 = vmatprep.subr.mxu0 0.0
        %1045 = vmatpush1.msra.mxu0 0.0
        %1046 = vmatprep.subr.mxu0 0.0
        %1047 = vmatpush1.msra.mxu0 0.0
        %1048 = vmatprep.subr.mxu0 0.0
        %1049 = vmatpush1.msra.mxu0 0.0
        %1050 = vmatprep.subr.mxu0 0.0
        %1051 = vmatpush1.msra.mxu0 0.0
        %1052 = vmatprep.subr.mxu0 0.0
        %1053 = vmatpush1.msra.mxu0 0.0
        %1054 = vmatprep.subr.mxu0 0.0
        %1055 = vmatpush1.msra.mxu0 0.0
        %1056 = vmatprep.subr.mxu0 0.0
        %1057 = vmatpush1.msra.mxu0 0.0
        %1058 = vmatprep.subr.mxu0 0.0
        %1059 = vmatpush1.msra.mxu0 0.0
        %1060 = vmatprep.subr.mxu0 0.0
        %1061 = vmatpush1.msra.mxu0 0.0
        %1062 = vmatprep.subr.mxu0 0.0
        %1063 = vmatpush1.msra.mxu0 0.0
        %1064 = vmatprep.subr.mxu0 0.0
        %1065 = vmatpush1.msra.mxu0 0.0
        %1066 = vmatprep.subr.mxu0 0.0
        %1067 = vmatpush1.msra.mxu0 0.0
        %1068 = vmatprep.subr.mxu0 0.0
        %1069 = vmatpush1.msra.mxu0 0.0
        %1070 = vmatprep.subr.mxu0 0.0
        %1071 = vmatpush1.msra.mxu0 0.0
        %1072 = vmatprep.subr.mxu0 0.0
        %1073 = vmatpush1.msra.mxu0 0.0
        %1074 = vmatprep.subr.mxu0 0.0
        %1075 = vmatpush1.msra.mxu0 0.0
        %1076 = vmatprep.subr.mxu0 0.0
        %1077 = vmatpush1.msra.mxu0 0.0
        %1078 = vmatprep.subr.mxu0 0.0
        %1079 = vmatpush1.msra.mxu0 0.0
        %1080 = vmatprep.subr.mxu0 0.0
        %1081 = vmatpush1.msra.mxu0 0.0
        %1082 = vmatprep.subr.mxu0 0.0
        %1083 = vmatpush1.msra.mxu0 0.0
        %1084 = vmatprep.subr.mxu0 0.0
        %1085 = vmatpush1.msra.mxu0 0.0
        %1086 = vmatprep.subr.mxu0 0.0
        %1087 = vmatpush1.msra.mxu0 0.0
        %1088 = vmatprep.subr.mxu0 0.0
        %1089 = vmatpush1.msra.mxu0 0.0
        %1090 = vmatprep.mubr.f32.mxu0 0.0
        %1091 = vmatmul.mubr.f32.gmra.mrb[0].mxu0 %v1024
        %v1092 = vpop.f32.mrb[0].mxu0
        %v1093 = vadd.f32 0.0, %v1092
        %v1094 = vpop.f32.mrb[0].mxu0
        %1095 = vdwg.mxu0
        %v1097 = vsel %vm245, %v852, 0
        %1099 = vmatprep.subr.mxu0 0.0
        %1100 = vmatpush1.msra.mxu0 %v1011
        %1101 = vmatprep.subr.mxu0 0.0
        %1102 = vmatpush1.msra.mxu0 %v1012
        %1103 = vmatprep.subr.mxu0 0.0
        %1104 = vmatpush1.msra.mxu0 %v1013
        %1105 = vmatprep.subr.mxu0 0.0
        %1106 = vmatpush1.msra.mxu0 %v1014
        %1107 = vmatprep.subr.mxu0 0.0
        %1108 = vmatpush1.msra.mxu0 0.0
        %1109 = vmatprep.subr.mxu0 0.0
        %1110 = vmatpush1.msra.mxu0 0.0
        %1111 = vmatprep.subr.mxu0 0.0
        %1112 = vmatpush1.msra.mxu0 0.0
        %1113 = vmatprep.subr.mxu0 0.0
        %1114 = vmatpush1.msra.mxu0 0.0
        %1115 = vmatprep.subr.mxu0 0.0
        %1116 = vmatpush1.msra.mxu0 0.0
        %1117 = vmatprep.subr.mxu0 0.0
        %1118 = vmatpush1.msra.mxu0 0.0
        %1119 = vmatprep.subr.mxu0 0.0
        %1120 = vmatpush1.msra.mxu0 0.0
        %1121 = vmatprep.subr.mxu0 0.0
        %1122 = vmatpush1.msra.mxu0 0.0
        %1123 = vmatprep.subr.mxu0 0.0
        %1124 = vmatpush1.msra.mxu0 0.0
        %1125 = vmatprep.subr.mxu0 0.0
        %1126 = vmatpush1.msra.mxu0 0.0
        %1127 = vmatprep.subr.mxu0 0.0
        %1128 = vmatpush1.msra.mxu0 0.0
        %1129 = vmatprep.subr.mxu0 0.0
        %1130 = vmatpush1.msra.mxu0 0.0
        %1131 = vmatprep.subr.mxu0 0.0
        %1132 = vmatpush1.msra.mxu0 0.0
        %1133 = vmatprep.subr.mxu0 0.0
        %1134 = vmatpush1.msra.mxu0 0.0
        %1135 = vmatprep.subr.mxu0 0.0
        %1136 = vmatpush1.msra.mxu0 0.0
        %1137 = vmatprep.subr.mxu0 0.0
        %1138 = vmatpush1.msra.mxu0 0.0
        %1139 = vmatprep.subr.mxu0 0.0
        %1140 = vmatpush1.msra.mxu0 0.0
        %1141 = vmatprep.subr.mxu0 0.0
        %1142 = vmatpush1.msra.mxu0 0.0
        %1143 = vmatprep.subr.mxu0 0.0
        %1144 = vmatpush1.msra.mxu0 0.0
        %1145 = vmatprep.subr.mxu0 0.0
        %1146 = vmatpush1.msra.mxu0 0.0
        %1147 = vmatprep.subr.mxu0 0.0
        %1148 = vmatpush1.msra.mxu0 0.0
        %1149 = vmatprep.subr.mxu0 0.0
        %1150 = vmatpush1.msra.mxu0 0.0
        %1151 = vmatprep.subr.mxu0 0.0
        %1152 = vmatpush1.msra.mxu0 0.0
        %1153 = vmatprep.subr.mxu0 0.0
        %1154 = vmatpush1.msra.mxu0 0.0
        %1155 = vmatprep.subr.mxu0 0.0
        %1156 = vmatpush1.msra.mxu0 0.0
        %1157 = vmatprep.subr.mxu0 0.0
        %1158 = vmatpush1.msra.mxu0 0.0
        %1159 = vmatprep.subr.mxu0 0.0
        %1160 = vmatpush1.msra.mxu0 0.0
        %1161 = vmatprep.subr.mxu0 0.0
        %1162 = vmatpush1.msra.mxu0 0.0
        %1163 = vmatprep.mubr.f32.mxu0 0.0
        %1164 = vmatmul.mubr.f32.gmra.mrb[0].mxu0 %v1097
        %v1165 = vpop.f32.mrb[0].mxu0
        %v1166 = vadd.f32 0.0, %v1165
        %v1167 = vpop.f32.mrb[0].mxu0
        %1168 = vdwg.mxu0
        %v1170 = vsel %vm245, %v928, 0
        %1172 = vmatprep.subr.mxu0 0.0
        %1173 = vmatpush1.msra.mxu0 %v1015
        %1174 = vmatprep.subr.mxu0 0.0
        %1175 = vmatpush1.msra.mxu0 %v1016
        %1176 = vmatprep.subr.mxu0 0.0
        %1177 = vmatpush1.msra.mxu0 %v1017
        %1178 = vmatprep.subr.mxu0 0.0
        %1179 = vmatpush1.msra.mxu0 %v1018
        %1180 = vmatprep.subr.mxu0 0.0
        %1181 = vmatpush1.msra.mxu0 0.0
        %1182 = vmatprep.subr.mxu0 0.0
        %1183 = vmatpush1.msra.mxu0 0.0
        %1184 = vmatprep.subr.mxu0 0.0
        %1185 = vmatpush1.msra.mxu0 0.0
        %1186 = vmatprep.subr.mxu0 0.0
        %1187 = vmatpush1.msra.mxu0 0.0
        %1188 = vmatprep.subr.mxu0 0.0
        %1189 = vmatpush1.msra.mxu0 0.0
        %1190 = vmatprep.subr.mxu0 0.0
        %1191 = vmatpush1.msra.mxu0 0.0
        %1192 = vmatprep.subr.mxu0 0.0
        %1193 = vmatpush1.msra.mxu0 0.0
        %1194 = vmatprep.subr.mxu0 0.0
        %1195 = vmatpush1.msra.mxu0 0.0
        %1196 = vmatprep.subr.mxu0 0.0
        %1197 = vmatpush1.msra.mxu0 0.0
        %1198 = vmatprep.subr.mxu0 0.0
        %1199 = vmatpush1.msra.mxu0 0.0
        %1200 = vmatprep.subr.mxu0 0.0
        %1201 = vmatpush1.msra.mxu0 0.0
        %1202 = vmatprep.subr.mxu0 0.0
        %1203 = vmatpush1.msra.mxu0 0.0
        %1204 = vmatprep.subr.mxu0 0.0
        %1205 = vmatpush1.msra.mxu0 0.0
        %1206 = vmatprep.subr.mxu0 0.0
        %1207 = vmatpush1.msra.mxu0 0.0
        %1208 = vmatprep.subr.mxu0 0.0
        %1209 = vmatpush1.msra.mxu0 0.0
        %1210 = vmatprep.subr.mxu0 0.0
        %1211 = vmatpush1.msra.mxu0 0.0
        %1212 = vmatprep.subr.mxu0 0.0
        %1213 = vmatpush1.msra.mxu0 0.0
        %1214 = vmatprep.subr.mxu0 0.0
        %1215 = vmatpush1.msra.mxu0 0.0
        %1216 = vmatprep.subr.mxu0 0.0
        %1217 = vmatpush1.msra.mxu0 0.0
        %1218 = vmatprep.subr.mxu0 0.0
        %1219 = vmatpush1.msra.mxu0 0.0
        %1220 = vmatprep.subr.mxu0 0.0
        %1221 = vmatpush1.msra.mxu0 0.0
        %1222 = vmatprep.subr.mxu0 0.0
        %1223 = vmatpush1.msra.mxu0 0.0
        %1224 = vmatprep.subr.mxu0 0.0
        %1225 = vmatpush1.msra.mxu0 0.0
        %1226 = vmatprep.subr.mxu0 0.0
        %1227 = vmatpush1.msra.mxu0 0.0
        %1228 = vmatprep.subr.mxu0 0.0
        %1229 = vmatpush1.msra.mxu0 0.0
        %1230 = vmatprep.subr.mxu0 0.0
        %1231 = vmatpush1.msra.mxu0 0.0
        %1232 = vmatprep.subr.mxu0 0.0
        %1233 = vmatpush1.msra.mxu0 0.0
        %1234 = vmatprep.subr.mxu0 0.0
        %1235 = vmatpush1.msra.mxu0 0.0
        %1236 = vmatprep.mubr.f32.mxu0 0.0
        %1237 = vmatmul.mubr.f32.gmra.mrb[0].mxu0 %v1170
        %v1238 = vpop.f32.mrb[0].mxu0
        %v1239 = vadd.f32 0.0, %v1238
        %v1240 = vpop.f32.mrb[0].mxu0
        %1241 = vdwg.mxu0
        %v1243 = vsel %vm245, %v1004, 0
        %1245 = vmatprep.subr.mxu0 0.0
        %1246 = vmatpush1.msra.mxu0 %v1019
        %1247 = vmatprep.subr.mxu0 0.0
        %1248 = vmatpush1.msra.mxu0 %v1020
        %1249 = vmatprep.subr.mxu0 0.0
        %1250 = vmatpush1.msra.mxu0 %v1021
        %1251 = vmatprep.subr.mxu0 0.0
        %1252 = vmatpush1.msra.mxu0 %v1022
        %1253 = vmatprep.subr.mxu0 0.0
        %1254 = vmatpush1.msra.mxu0 0.0
        %1255 = vmatprep.subr.mxu0 0.0
        %1256 = vmatpush1.msra.mxu0 0.0
        %1257 = vmatprep.subr.mxu0 0.0
        %1258 = vmatpush1.msra.mxu0 0.0
        %1259 = vmatprep.subr.mxu0 0.0
        %1260 = vmatpush1.msra.mxu0 0.0
        %1261 = vmatprep.subr.mxu0 0.0
        %1262 = vmatpush1.msra.mxu0 0.0
        %1263 = vmatprep.subr.mxu0 0.0
        %1264 = vmatpush1.msra.mxu0 0.0
        %1265 = vmatprep.subr.mxu0 0.0
        %1266 = vmatpush1.msra.mxu0 0.0
        %1267 = vmatprep.subr.mxu0 0.0
        %1268 = vmatpush1.msra.mxu0 0.0
        %1269 = vmatprep.subr.mxu0 0.0
        %1270 = vmatpush1.msra.mxu0 0.0
        %1271 = vmatprep.subr.mxu0 0.0
        %1272 = vmatpush1.msra.mxu0 0.0
        %1273 = vmatprep.subr.mxu0 0.0
        %1274 = vmatpush1.msra.mxu0 0.0
        %1275 = vmatprep.subr.mxu0 0.0
        %1276 = vmatpush1.msra.mxu0 0.0
        %1277 = vmatprep.subr.mxu0 0.0
        %1278 = vmatpush1.msra.mxu0 0.0
        %1279 = vmatprep.subr.mxu0 0.0
        %1280 = vmatpush1.msra.mxu0 0.0
        %1281 = vmatprep.subr.mxu0 0.0
        %1282 = vmatpush1.msra.mxu0 0.0
        %1283 = vmatprep.subr.mxu0 0.0
        %1284 = vmatpush1.msra.mxu0 0.0
        %1285 = vmatprep.subr.mxu0 0.0
        %1286 = vmatpush1.msra.mxu0 0.0
        %1287 = vmatprep.subr.mxu0 0.0
        %1288 = vmatpush1.msra.mxu0 0.0
        %1289 = vmatprep.subr.mxu0 0.0
        %1290 = vmatpush1.msra.mxu0 0.0
        %1291 = vmatprep.subr.mxu0 0.0
        %1292 = vmatpush1.msra.mxu0 0.0
        %1293 = vmatprep.subr.mxu0 0.0
        %1294 = vmatpush1.msra.mxu0 0.0
        %1295 = vmatprep.subr.mxu0 0.0
        %1296 = vmatpush1.msra.mxu0 0.0
        %1297 = vmatprep.subr.mxu0 0.0
        %1298 = vmatpush1.msra.mxu0 0.0
        %1299 = vmatprep.subr.mxu0 0.0
        %1300 = vmatpush1.msra.mxu0 0.0
        %1301 = vmatprep.subr.mxu0 0.0
        %1302 = vmatpush1.msra.mxu0 0.0
        %1303 = vmatprep.subr.mxu0 0.0
        %1304 = vmatpush1.msra.mxu0 0.0
        %1305 = vmatprep.subr.mxu0 0.0
        %1306 = vmatpush1.msra.mxu0 0.0
        %1307 = vmatprep.subr.mxu0 0.0
        %1308 = vmatpush1.msra.mxu0 0.0
        %1309 = vmatprep.mubr.f32.mxu0 0.0
        %1310 = vmatmul.mubr.f32.gmra.mrb[0].mxu0 %v1243
        %v1311 = vpop.f32.mrb[0].mxu0
        %v1312 = vadd.f32 0.0, %v1311
        %v1313 = vpop.f32.mrb[0].mxu0
        %1314 = vdwg.mxu0
        %v1315 = vadd.f32 %v1093, %v1166
        %v1316 = vadd.f32 %v1315, %v1239
        %v1317 = vadd.f32 %v1316, %v1312
        %v1318 = vld [vmem:[%s4] sm:$0x1]
        %v1320 = vlaneseq
        %v1321 = vshrl.u32 %v1320, 7
        %v1322 = vsub.s32 0, %v1321
        %v1323 = vrot.slane %v1318, %v1322
        %v1325 = vadd.f32 %v1317, %v1323
        %1326 = vst [vmem:[%s228] sm:$0xff] %v1325
        %s1327 = sand.u32 %s142, 1
        %s1328 = scalar_lea.sflag [#allocation3], %s1327
        %s1329 = sand.u32 %s142, 1
        %s1330 = smul.addr %s1329, 8
        %s1331 = scalar_lea.vmem [#allocation2], %s1330
        // Predicated region
        $region41: #{multi_head_self_attention.1} parent=39 // pred_check
          %p1332 = pneg %p152
        $region42: #{multi_head_self_attention.1} parent=39 // pred_check_branch
          %1334 = sbr.rel (%p1332) target = $region44
        $region43: #{multi_head_self_attention.1} parent=39 // pred_region
          %s1336 = ssub.s32 128, 128
          %1337 = vsyncadd %s1328, %s1336
          %s1338 = smul.addr %s19, 128
          %s1339 = scalar_lea.hbm %s5, %s1338
          %s1341 = sshll.u32 %s1331, 4
          %s1342 = int_to_ptr.vmem [resolvable:$true] %s1341
          %1344 = dma.vmem_to_hbm [thread:$0]  %s1342, 128, %s1339, %s1328
        $region44: #{multi_head_self_attention.1} parent=39 // pred_fallthru
          _
      $region40: #{multi_head_self_attention.1} parent=5 // pred_fallthru
        _
      %p1345 = scmp.le.s32.totalorder 2, %s14
      // Predicated region
      $region45: #{multi_head_self_attention.1} parent=5 // pred_check
        %p1346 = pneg %p1345
      $region46: #{multi_head_self_attention.1} parent=5 // pred_check_branch
        %1348 = sbr.rel (%p1346) target = $region48
      $region47: #{multi_head_self_attention.1} parent=5 // pred_region
        %s1349 = ssub.s32 %s14, 2
        // Predicated region
        $region49: #{multi_head_self_attention.1} parent=47 // pred_check
          %p1350 = pneg %p158
        $region50: #{multi_head_self_attention.1} parent=47 // pred_check_branch
          %1352 = sbr.rel (%p1350) target = $region52
        $region51: #{multi_head_self_attention.1} parent=47 // pred_region
          %s1353 = sand.u32 %s143, 1
          %s1354 = scalar_lea.sflag [#allocation3], %s1353
          %s1355 = sand.u32 %s143, 1
          %s1356 = smul.addr %s1355, 8
          %s1357 = scalar_lea.vmem [#allocation2], %s1356
          %1358 = dma.done %s1354, 128
        $region52: #{multi_head_self_attention.1} parent=47 // pred_fallthru
          _
      $region48: #{multi_head_self_attention.1} parent=5 // pred_fallthru
        _
    $region6: #{multi_head_self_attention.1} parent=1 // loop_footer
      %s18 = sadd.s32 1, %s14
    $region7: #{multi_head_self_attention.1} parent=1 // loop_footer_branch
      %13 = sbr.rel target = $region3
    $region8: #{multi_head_self_attention.1} parent=1 // loop_exit
      _
    %1359 = vsyncpa [#allocation3], 1
    %s1360 = scalar_lea.sflag [#allocation3], 1
    %1361 = vsyncpa %s1360, 1

</llo_original>
